<compile_context>
chip_gen: v5e
topology: v5e:2x2
jax: 0.10.0
libtpu: 0.0.40
codegen_flags: <defaults>
</compile_context>

<pallas_src>
import jax
import jax.numpy as jnp
import numpy as np
from jax.experimental import pallas as pl
from jax.experimental.pallas import tpu as pltpu


def _round_up(n: int, m: int) -> int:
    return ((n + m - 1) // m) * m


def _vmem_capacity_bytes() -> int:
    """Physical VMEM per TensorCore (v5e/v6e 128 MiB, v7x 64 MiB)."""
    try:
        info = pltpu.get_tpu_info()
        cap = int(getattr(info, "vmem_capacity_bytes", 0) or 0)
        if cap > 0:
            return cap
    except Exception:
        pass
    return 64 * 1024 * 1024   # conservative fallback (v7x per-TC)


def _choose_batch_tile(B, Gp, H0p, H1p, Lp, weight_bytes, vmem_budget,
                       requested, out_itemsize=4):
    """Largest TB (multiple of 8, <= requested) whose footprint fits VMEM,
    with >=2 grid steps when the batch allows it (v7x megacore)."""
    tb = max(8, min(_round_up(requested, 8), _round_up(B, 8)))

    def footprint(t):
        xbuf = 2 * t * Gp * 2                    # double-buffered bf16 x tiles
        obuf = 2 * t * Lp * out_itemsize         # double-buffered out tiles
        act = 2 * t * (H0p + H1p + Lp) * 4       # f32 temps headroom
        return weight_bytes + xbuf + obuf + act

    while tb > 8 and footprint(tb) > vmem_budget:
        tb = max(8, _round_up(tb // 2, 8))

    # Guarantee >= 2 grid steps so "parallel" can shard across v7x's 2 TCs.
    if B >= 16 and pl.cdiv(B, tb) < 2:
        tb = max(8, _round_up(pl.cdiv(B, 2), 8))
    return tb


# --------------------------------------------------------------------------- #
# Kernel
# --------------------------------------------------------------------------- #
def encoder_kernel(prelu_ref,                 # SMEM (2,): PReLU scalars (f32)
                   x_ref,                     # VMEM (TB, Gp) bf16 batch tile
                   w0_ref, b0_ref,            # (Gp, H0p) bf16, (1, H0p) f32   (BN folded)
                   w1_ref, b1_ref,            # (H0p, H1p) bf16, (1, H1p) f32  (BN folded)
                   wf_ref, bf_ref,            # (H1p, Lp) bf16, (1, Lp) f32
                   out_ref):                  # VMEM (TB, Lp)
    cd = w0_ref.dtype  # matmul operand dtype (bf16); accumulate in f32

    # ---- layer 0: Linear(+folded BN) -> PReLU  (x already bf16, no cast) ----
    h = jnp.dot(x_ref[...], w0_ref[...],
                preferred_element_type=jnp.float32) + b0_ref[...]
    a0 = prelu_ref[0]
    h = jnp.where(h >= 0, h, a0 * h)

    # ---- layer 1: Linear(+folded BN) -> PReLU ----
    h = jnp.dot(h.astype(cd), w1_ref[...],
                preferred_element_type=jnp.float32) + b1_ref[...]
    a1 = prelu_ref[1]
    h = jnp.where(h >= 0, h, a1 * h)

    # ---- final linear to (padded) latent space ----
    z = jnp.dot(h.astype(cd), wf_ref[...],
                preferred_element_type=jnp.float32) + bf_ref[...]

    # ---- F.normalize(z, p=2, dim=1) == z / max(||z||, 1e-12) ----
    # (padded latent columns of z are exactly 0, so they don't affect the norm)
    ss = jnp.sum(z * z, axis=1, keepdims=True)
    inv = jax.lax.rsqrt(jnp.maximum(ss, 1e-24))   # EUP slot, not VALU divide
    out_ref[...] = (z * inv).astype(out_ref.dtype)


# --------------------------------------------------------------------------- #
# Parameter preparation (wrapper-side, zero runtime cost inside the kernel)
# --------------------------------------------------------------------------- #
def fold_and_pad_params(params, compute_dtype=jnp.bfloat16, lane=128):
    """Fold eval-mode BN into the linears, pad all feature dims to `lane`,
    and cast matmul weights to `compute_dtype` (biases stay f32)."""
    w0 = params["w0"] * params["s0"]
    b0 = params["b0"] * params["s0"] + params["t0"]
    w1 = params["w1"] * params["s1"]
    b1 = params["b1"] * params["s1"] + params["t1"]
    wf, bf = params["wf"], params["bf"]

    G, H0 = w0.shape
    H1 = w1.shape[1]
    L = wf.shape[1]
    Gp, H0p, H1p, Lp = (_round_up(d, lane) for d in (G, H0, H1, L))

    def pad2(a, r, c):
        return jnp.pad(a, ((0, r - a.shape[0]), (0, c - a.shape[1])))

    kparams = dict(
        w0=pad2(w0, Gp, H0p).astype(compute_dtype),
        b0=pad2(b0, 1, H0p).astype(jnp.float32),
        w1=pad2(w1, H0p, H1p).astype(compute_dtype),
        b1=pad2(b1, 1, H1p).astype(jnp.float32),
        wf=pad2(wf, H1p, Lp).astype(compute_dtype),
        bf=pad2(bf, 1, Lp).astype(jnp.float32),
        prelu=params["prelu"].astype(jnp.float32),
    )
    meta = dict(G=G, Gp=Gp, L=L, Lp=Lp)
    return kparams, meta


# --------------------------------------------------------------------------- #
# Forward wrapper
# --------------------------------------------------------------------------- #
def encoder_forward(x, kparams, meta, *, batch_tile=512, out_dtype=jnp.float32):
    """x: (B, num_genes). kparams/meta from fold_and_pad_params."""
    B, G = x.shape
    assert G == meta["G"]
    Gp, L, Lp = meta["Gp"], meta["L"], meta["Lp"]
    H0p = kparams["w0"].shape[1]
    H1p = kparams["w1"].shape[1]

    # Stream x in bf16 (matmul operand dtype); fuse the cast into the lane pad.
    # No batch-dim padding: Pallas clips the last partial block's writeback and
    # rows >= B never leave the kernel (they're also sliced off below).
    x_in = x.astype(jnp.bfloat16)
    if Gp != G:
        x_in = jnp.pad(x_in, ((0, 0), (0, Gp - G)))

    weight_keys = ("w0", "b0", "w1", "b1", "wf", "bf")
    weight_bytes = sum(int(np.prod(kparams[k].shape)) * kparams[k].dtype.itemsize
                       for k in weight_keys)

    vmem_budget = int(0.8 * _vmem_capacity_bytes())   # v7x ~51 MiB, v5e/v6e ~102 MiB
    out_itemsize = jnp.dtype(out_dtype).itemsize

    TB = _choose_batch_tile(B, Gp, H0p, H1p, Lp, weight_bytes, vmem_budget,
                            batch_tile, out_itemsize)
    num_blocks = pl.cdiv(B, TB)
    grid = (num_blocks,)

    # Advisory cost estimate for XLA scheduling.
    B_eff = int(num_blocks) * TB
    flops = 2 * B_eff * (Gp * H0p + H0p * H1p + H1p * Lp)
    bytes_accessed = int(B * Gp * 2 + B * Lp * out_itemsize + weight_bytes)
    cost = pl.CostEstimate(flops=int(flops), transcendentals=int(B_eff),
                           bytes_accessed=bytes_accessed)

    compiler_params = pltpu.CompilerParams(
        dimension_semantics=("parallel",),        # megacore split on v7x
        vmem_limit_bytes=vmem_budget)

    args = (kparams["prelu"], x_in,
            kparams["w0"], kparams["b0"],
            kparams["w1"], kparams["b1"],
            kparams["wf"], kparams["bf"])

    def build_specs(single_buffer_weights):
        def resident(arr):  # whole-array block, same block every step -> resident
            r, c = arr.shape
            if single_buffer_weights:
                return pl.BlockSpec((r, c), lambda i: (0, 0),
                                    pipeline_mode=pl.Buffered(1))
            return pl.BlockSpec((r, c), lambda i: (0, 0))

        in_specs = [
            pl.BlockSpec(memory_space=pltpu.MemorySpace.SMEM),   # prelu scalars
            pl.BlockSpec((TB, Gp), lambda i: (i, 0)),            # bf16 x tile
            resident(kparams["w0"]), resident(kparams["b0"]),
            resident(kparams["w1"]), resident(kparams["b1"]),
            resident(kparams["wf"]), resident(kparams["bf"]),
        ]
        out_specs = pl.BlockSpec((TB, Lp), lambda i: (i, 0))
        return in_specs, out_specs

    def run(single_buffer_weights):
        in_specs, out_specs = build_specs(single_buffer_weights)
        return pl.pallas_call(
            encoder_kernel,
            out_shape=jax.ShapeDtypeStruct((B, Lp), out_dtype),
            grid=grid,
            in_specs=in_specs,
            out_specs=out_specs,
            compiler_params=compiler_params,
            cost_estimate=cost,
        )(*args)

    try:
        out_padded = jax.block_until_ready(run(True))
    except Exception:
        # Fallback if this jax/Mosaic build rejects single-buffering (Buffered(1)).
        out_padded = jax.block_until_ready(run(False))

    return out_padded[:, :L]


# --------------------------------------------------------------------------- #
# Synthetic parameters + pure-JAX reference
# --------------------------------------------------------------------------- #
def make_params(key, num_genes, hidden_dim, latent_dim, dtype=jnp.float32):
    """Deterministic synthetic parameters matching the PyTorch module's shapes."""
    ks = jax.random.split(key, 3)
    h0, h1 = hidden_dim
    eps = 1e-5

    def linear(k, fan_in, fan_out):
        bound = 1.0 / np.sqrt(fan_in)
        kw, kb = jax.random.split(k)
        w = jax.random.uniform(kw, (fan_in, fan_out), dtype, -bound, bound)
        b = jax.random.uniform(kb, (1, fan_out), dtype, -bound, bound)
        return w, b

    w0, b0 = linear(ks[0], num_genes, h0)
    w1, b1 = linear(ks[1], h0, h1)
    wf, bf = linear(ks[2], h1, latent_dim)

    # BatchNorm1d default buffers/params, eval mode, folded to (scale, shift).
    def bn_affine(dim):
        gamma = jnp.ones((1, dim), dtype)
        beta = jnp.zeros((1, dim), dtype)
        mean = jnp.zeros((1, dim), dtype)
        var = jnp.ones((1, dim), dtype)
        scale = gamma / jnp.sqrt(var + eps)
        shift = beta - mean * scale
        return scale, shift

    s0, t0 = bn_affine(h0)
    s1, t1 = bn_affine(h1)

    prelu = jnp.array([0.25, 0.25], dtype=jnp.float32)  # PyTorch PReLU default

    return dict(w0=w0, b0=b0, s0=s0, t0=t0,
                w1=w1, b1=b1, s1=s1, t1=t1,
                wf=wf, bf=bf, prelu=prelu)


def encoder_reference(x, p):
    """Pure-JAX f32 reference for correctness checking."""
    a0, a1 = p["prelu"][0], p["prelu"][1]
    h = x @ p["w0"] + p["b0"]
    h = h * p["s0"] + p["t0"]
    h = jnp.where(h >= 0, h, a0 * h)
    h = h @ p["w1"] + p["b1"]
    h = h * p["s1"] + p["t1"]
    h = jnp.where(h >= 0, h, a1 * h)
    z = h @ p["wf"] + p["bf"]
    n = jnp.sqrt(jnp.sum(z * z, axis=1, keepdims=True))
    return z / jnp.maximum(n, 1e-12)


if __name__ == "__main__":
    B, NUM_GENES, HIDDEN, LATENT = 8, 32, [128, 128], 64

    key = jax.random.PRNGKey(0)
    kx, kp = jax.random.split(key)
    x = jax.random.normal(kx, (B, NUM_GENES), jnp.float32)
    raw_params = make_params(kp, NUM_GENES, HIDDEN, LATENT)

    kparams, meta = fold_and_pad_params(raw_params, compute_dtype=jnp.bfloat16)

    out = encoder_forward(x, kparams, meta)
    out = jax.block_until_ready(out)

    ref = encoder_reference(x, raw_params)
    # bf16 matmul operands (including bf16 x stream) with f32 accumulation ->
    # loosened tolerance vs the f32 reference.
    np.testing.assert_allclose(np.asarray(out), np.asarray(ref),
                               rtol=2e-2, atol=2e-2)
    assert out.shape == (B, LATENT)

    print("KERNEL_OK")
</pallas_src>

<mosaic_0001>
module attributes {stable_mosaic.version = 11 : i64} {
  func.func @encoder_kernel(%arg0: i32, %arg1: memref<2xf32, #tpu.memory_space<smem>>, %arg2: memref<8x128xbf16, #tpu.memory_space<vmem>>, %arg3: memref<128x128xbf16, #tpu.memory_space<vmem>>, %arg4: memref<1x128xf32, #tpu.memory_space<vmem>>, %arg5: memref<128x128xbf16, #tpu.memory_space<vmem>>, %arg6: memref<1x128xf32, #tpu.memory_space<vmem>>, %arg7: memref<128x128xbf16, #tpu.memory_space<vmem>>, %arg8: memref<1x128xf32, #tpu.memory_space<vmem>>, %arg9: memref<8x128xf32, #tpu.memory_space<vmem>>) attributes {dimension_semantics = [#tpu.dimension_semantics<parallel>], iteration_bounds = array<i64: 1>, scalar_prefetch = 0 : i64, scratch_operands = 0 : i64, tpu.core_type = #tpu.core_type<tc>, window_params = [{transform_indices = @transform_0, window_bounds = array<i64: 2>}, {transform_indices = @transform_1, window_bounds = array<i64: 8, 128>}, {pipeline_mode = #tpu.pipeline_mode<synchronous>, transform_indices = @transform_2, window_bounds = array<i64: 128, 128>}, {pipeline_mode = #tpu.pipeline_mode<synchronous>, transform_indices = @transform_3, window_bounds = array<i64: 1, 128>}, {pipeline_mode = #tpu.pipeline_mode<synchronous>, transform_indices = @transform_4, window_bounds = array<i64: 128, 128>}, {pipeline_mode = #tpu.pipeline_mode<synchronous>, transform_indices = @transform_5, window_bounds = array<i64: 1, 128>}, {pipeline_mode = #tpu.pipeline_mode<synchronous>, transform_indices = @transform_6, window_bounds = array<i64: 128, 128>}, {pipeline_mode = #tpu.pipeline_mode<synchronous>, transform_indices = @transform_7, window_bounds = array<i64: 1, 128>}, {transform_indices = @transform_8, window_bounds = array<i64: 8, 128>}]} {
    %c0 = arith.constant 0 : index
    %c0_0 = arith.constant 0 : index
    %0 = vector.load %arg2[%c0, %c0_0] : memref<8x128xbf16, #tpu.memory_space<vmem>>, vector<8x128xbf16>
    %c0_1 = arith.constant 0 : index
    %c0_2 = arith.constant 0 : index
    %1 = vector.load %arg3[%c0_1, %c0_2] : memref<128x128xbf16, #tpu.memory_space<vmem>>, vector<128x128xbf16>
    %cst = arith.constant dense<0.000000e+00> : vector<8x128xf32>
    %2 = tpu.matmul %0, %1, %cst {dimension_numbers = #tpu.dot_dimension_numbers<[1], [0], [0], [1], [0, 0, 1, 1], [], []>} : vector<8x128xbf16>, vector<128x128xbf16>, vector<8x128xf32> -> vector<8x128xf32>
    %c0_3 = arith.constant 0 : index
    %c0_4 = arith.constant 0 : index
    %3 = vector.load %arg4[%c0_3, %c0_4] : memref<1x128xf32, #tpu.memory_space<vmem>>, vector<1x128xf32>
    %4 = vector.broadcast %3 : vector<1x128xf32> to vector<8x128xf32>
    %5 = arith.addf %2, %4 : vector<8x128xf32>
    %c0_5 = arith.constant 0 : index
    %6 = memref.load %arg1[%c0_5] : memref<2xf32, #tpu.memory_space<smem>>
    %cst_6 = arith.constant 0.000000e+00 : f32
    %7 = vector.broadcast %cst_6 : f32 to vector<8x128xf32>
    %8 = arith.cmpf oge, %5, %7 : vector<8x128xf32>
    %9 = vector.broadcast %6 : f32 to vector<8x128xf32>
    %10 = arith.mulf %9, %5 : vector<8x128xf32>
    %11 = arith.select %8, %5, %10 : vector<8x128xi1>, vector<8x128xf32>
    %12 = arith.truncf %11 : vector<8x128xf32> to vector<8x128xbf16>
    %c0_7 = arith.constant 0 : index
    %c0_8 = arith.constant 0 : index
    %13 = vector.load %arg5[%c0_7, %c0_8] : memref<128x128xbf16, #tpu.memory_space<vmem>>, vector<128x128xbf16>
    %cst_9 = arith.constant dense<0.000000e+00> : vector<8x128xf32>
    %14 = tpu.matmul %12, %13, %cst_9 {dimension_numbers = #tpu.dot_dimension_numbers<[1], [0], [0], [1], [0, 0, 1, 1], [], []>} : vector<8x128xbf16>, vector<128x128xbf16>, vector<8x128xf32> -> vector<8x128xf32>
    %c0_10 = arith.constant 0 : index
    %c0_11 = arith.constant 0 : index
    %15 = vector.load %arg6[%c0_10, %c0_11] : memref<1x128xf32, #tpu.memory_space<vmem>>, vector<1x128xf32>
    %16 = vector.broadcast %15 : vector<1x128xf32> to vector<8x128xf32>
    %17 = arith.addf %14, %16 : vector<8x128xf32>
    %c1 = arith.constant 1 : index
    %18 = memref.load %arg1[%c1] : memref<2xf32, #tpu.memory_space<smem>>
    %cst_12 = arith.constant 0.000000e+00 : f32
    %19 = vector.broadcast %cst_12 : f32 to vector<8x128xf32>
    %20 = arith.cmpf oge, %17, %19 : vector<8x128xf32>
    %21 = vector.broadcast %18 : f32 to vector<8x128xf32>
    %22 = arith.mulf %21, %17 : vector<8x128xf32>
    %23 = arith.select %20, %17, %22 : vector<8x128xi1>, vector<8x128xf32>
    %24 = arith.truncf %23 : vector<8x128xf32> to vector<8x128xbf16>
    %c0_13 = arith.constant 0 : index
    %c0_14 = arith.constant 0 : index
    %25 = vector.load %arg7[%c0_13, %c0_14] : memref<128x128xbf16, #tpu.memory_space<vmem>>, vector<128x128xbf16>
    %cst_15 = arith.constant dense<0.000000e+00> : vector<8x128xf32>
    %26 = tpu.matmul %24, %25, %cst_15 {dimension_numbers = #tpu.dot_dimension_numbers<[1], [0], [0], [1], [0, 0, 1, 1], [], []>} : vector<8x128xbf16>, vector<128x128xbf16>, vector<8x128xf32> -> vector<8x128xf32>
    %c0_16 = arith.constant 0 : index
    %c0_17 = arith.constant 0 : index
    %27 = vector.load %arg8[%c0_16, %c0_17] : memref<1x128xf32, #tpu.memory_space<vmem>>, vector<1x128xf32>
    %28 = vector.broadcast %27 : vector<1x128xf32> to vector<8x128xf32>
    %29 = arith.addf %26, %28 : vector<8x128xf32>
    %30 = arith.mulf %29, %29 : vector<8x128xf32>
    %cst_18 = arith.constant dense<0.000000e+00> : vector<8xf32>
    %31 = vector.multi_reduction <add>, %30, %cst_18 [1] : vector<8x128xf32> to vector<8xf32>
    %32 = vector.shape_cast %31 : vector<8xf32> to vector<8x1xf32>
    %cst_19 = arith.constant 1.000000e-24 : f32
    %33 = vector.broadcast %cst_19 : f32 to vector<8x1xf32>
    %34 = arith.maximumf %32, %33 : vector<8x1xf32>
    %35 = math.rsqrt %34 : vector<8x1xf32>
    %36 = vector.broadcast %35 : vector<8x1xf32> to vector<8x128xf32>
    %37 = arith.mulf %29, %36 : vector<8x128xf32>
    %c0_20 = arith.constant 0 : index
    %c0_21 = arith.constant 0 : index
    %38 = vector.load %arg9[%c0_20, %c0_21] : memref<8x128xf32, #tpu.memory_space<vmem>>, vector<8x128xf32>
    tpu.vector_store %arg9[%c0_20, %c0_21], %37 {strides = array<i32>} : memref<8x128xf32, #tpu.memory_space<vmem>>, vector<8x128xf32>,
    return
  }
  func.func @transform_0(%arg0: i32) -> i32 {
    %c0_i32 = arith.constant 0 : i32
    %c0_i32_0 = arith.constant 0 : i32
    return %c0_i32 : i32
  }
  func.func @transform_1(%arg0: i32) -> (i32, i32) {
    %c0_i32 = arith.constant 0 : i32
    %c0_i32_0 = arith.constant 0 : i32
    return %arg0, %c0_i32 : i32, i32
  }
  func.func @transform_2(%arg0: i32) -> (i32, i32) {
    %c0_i32 = arith.constant 0 : i32
    %c0_i32_0 = arith.constant 0 : i32
    %c0_i32_1 = arith.constant 0 : i32
    return %c0_i32, %c0_i32_0 : i32, i32
  }
  func.func @transform_3(%arg0: i32) -> (i32, i32) {
    %c0_i32 = arith.constant 0 : i32
    %c0_i32_0 = arith.constant 0 : i32
    %c0_i32_1 = arith.constant 0 : i32
    return %c0_i32, %c0_i32_0 : i32, i32
  }
  func.func @transform_4(%arg0: i32) -> (i32, i32) {
    %c0_i32 = arith.constant 0 : i32
    %c0_i32_0 = arith.constant 0 : i32
    %c0_i32_1 = arith.constant 0 : i32
    return %c0_i32, %c0_i32_0 : i32, i32
  }
  func.func @transform_5(%arg0: i32) -> (i32, i32) {
    %c0_i32 = arith.constant 0 : i32
    %c0_i32_0 = arith.constant 0 : i32
    %c0_i32_1 = arith.constant 0 : i32
    return %c0_i32, %c0_i32_0 : i32, i32
  }
  func.func @transform_6(%arg0: i32) -> (i32, i32) {
    %c0_i32 = arith.constant 0 : i32
    %c0_i32_0 = arith.constant 0 : i32
    %c0_i32_1 = arith.constant 0 : i32
    return %c0_i32, %c0_i32_0 : i32, i32
  }
  func.func @transform_7(%arg0: i32) -> (i32, i32) {
    %c0_i32 = arith.constant 0 : i32
    %c0_i32_0 = arith.constant 0 : i32
    %c0_i32_1 = arith.constant 0 : i32
    return %c0_i32, %c0_i32_0 : i32, i32
  }
  func.func @transform_8(%arg0: i32) -> (i32, i32) {
    %c0_i32 = arith.constant 0 : i32
    %c0_i32_0 = arith.constant 0 : i32
    return %arg0, %c0_i32 : i32, i32
  }
}

module attributes {stable_mosaic.version = 11 : i64} {
  func.func @encoder_kernel(%arg0: i32, %arg1: memref<2xf32, #tpu.memory_space<smem>>, %arg2: memref<8x128xbf16, #tpu.memory_space<vmem>>, %arg3: memref<128x128xbf16, #tpu.memory_space<vmem>>, %arg4: memref<1x128xf32, #tpu.memory_space<vmem>>, %arg5: memref<128x128xbf16, #tpu.memory_space<vmem>>, %arg6: memref<1x128xf32, #tpu.memory_space<vmem>>, %arg7: memref<128x128xbf16, #tpu.memory_space<vmem>>, %arg8: memref<1x128xf32, #tpu.memory_space<vmem>>, %arg9: memref<8x128xf32, #tpu.memory_space<vmem>>) attributes {dimension_semantics = [#tpu.dimension_semantics<parallel>], iteration_bounds = array<i64: 1>, scalar_prefetch = 0 : i64, scratch_operands = 0 : i64, tpu.core_type = #tpu.core_type<tc>, window_params = [{transform_indices = @transform_0, window_bounds = array<i64: 2>}, {transform_indices = @transform_1, window_bounds = array<i64: 8, 128>}, {pipeline_mode = #tpu.pipeline_mode<synchronous>, transform_indices = @transform_2, window_bounds = array<i64: 128, 128>}, {pipeline_mode = #tpu.pipeline_mode<synchronous>, transform_indices = @transform_3, window_bounds = array<i64: 1, 128>}, {pipeline_mode = #tpu.pipeline_mode<synchronous>, transform_indices = @transform_4, window_bounds = array<i64: 128, 128>}, {pipeline_mode = #tpu.pipeline_mode<synchronous>, transform_indices = @transform_5, window_bounds = array<i64: 1, 128>}, {pipeline_mode = #tpu.pipeline_mode<synchronous>, transform_indices = @transform_6, window_bounds = array<i64: 128, 128>}, {pipeline_mode = #tpu.pipeline_mode<synchronous>, transform_indices = @transform_7, window_bounds = array<i64: 1, 128>}, {transform_indices = @transform_8, window_bounds = array<i64: 8, 128>}]} {
    %c0 = arith.constant 0 : index
    %c0_0 = arith.constant 0 : index
    %0 = vector.load %arg2[%c0, %c0_0] : memref<8x128xbf16, #tpu.memory_space<vmem>>, vector<8x128xbf16>
    %c0_1 = arith.constant 0 : index
    %c0_2 = arith.constant 0 : index
    %1 = vector.load %arg3[%c0_1, %c0_2] : memref<128x128xbf16, #tpu.memory_space<vmem>>, vector<128x128xbf16>
    %cst = arith.constant dense<0.000000e+00> : vector<8x128xf32>
    %2 = tpu.matmul %0, %1, %cst {dimension_numbers = #tpu.dot_dimension_numbers<[1], [0], [0], [1], [0, 0, 1, 1], [], []>} : vector<8x128xbf16>, vector<128x128xbf16>, vector<8x128xf32> -> vector<8x128xf32>
    %c0_3 = arith.constant 0 : index
    %c0_4 = arith.constant 0 : index
    %3 = vector.load %arg4[%c0_3, %c0_4] : memref<1x128xf32, #tpu.memory_space<vmem>>, vector<1x128xf32>
    %4 = vector.broadcast %3 : vector<1x128xf32> to vector<8x128xf32>
    %5 = arith.addf %2, %4 : vector<8x128xf32>
    %c0_5 = arith.constant 0 : index
    %6 = memref.load %arg1[%c0_5] : memref<2xf32, #tpu.memory_space<smem>>
    %cst_6 = arith.constant 0.000000e+00 : f32
    %7 = vector.broadcast %cst_6 : f32 to vector<8x128xf32>
    %8 = arith.cmpf oge, %5, %7 : vector<8x128xf32>
    %9 = vector.broadcast %6 : f32 to vector<8x128xf32>
    %10 = arith.mulf %9, %5 : vector<8x128xf32>
    %11 = arith.select %8, %5, %10 : vector<8x128xi1>, vector<8x128xf32>
    %12 = arith.truncf %11 : vector<8x128xf32> to vector<8x128xbf16>
    %c0_7 = arith.constant 0 : index
    %c0_8 = arith.constant 0 : index
    %13 = vector.load %arg5[%c0_7, %c0_8] : memref<128x128xbf16, #tpu.memory_space<vmem>>, vector<128x128xbf16>
    %cst_9 = arith.constant dense<0.000000e+00> : vector<8x128xf32>
    %14 = tpu.matmul %12, %13, %cst_9 {dimension_numbers = #tpu.dot_dimension_numbers<[1], [0], [0], [1], [0, 0, 1, 1], [], []>} : vector<8x128xbf16>, vector<128x128xbf16>, vector<8x128xf32> -> vector<8x128xf32>
    %c0_10 = arith.constant 0 : index
    %c0_11 = arith.constant 0 : index
    %15 = vector.load %arg6[%c0_10, %c0_11] : memref<1x128xf32, #tpu.memory_space<vmem>>, vector<1x128xf32>
    %16 = vector.broadcast %15 : vector<1x128xf32> to vector<8x128xf32>
    %17 = arith.addf %14, %16 : vector<8x128xf32>
    %c1 = arith.constant 1 : index
    %18 = memref.load %arg1[%c1] : memref<2xf32, #tpu.memory_space<smem>>
    %cst_12 = arith.constant 0.000000e+00 : f32
    %19 = vector.broadcast %cst_12 : f32 to vector<8x128xf32>
    %20 = arith.cmpf oge, %17, %19 : vector<8x128xf32>
    %21 = vector.broadcast %18 : f32 to vector<8x128xf32>
    %22 = arith.mulf %21, %17 : vector<8x128xf32>
    %23 = arith.select %20, %17, %22 : vector<8x128xi1>, vector<8x128xf32>
    %24 = arith.truncf %23 : vector<8x128xf32> to vector<8x128xbf16>
    %c0_13 = arith.constant 0 : index
    %c0_14 = arith.constant 0 : index
    %25 = vector.load %arg7[%c0_13, %c0_14] : memref<128x128xbf16, #tpu.memory_space<vmem>>, vector<128x128xbf16>
    %cst_15 = arith.constant dense<0.000000e+00> : vector<8x128xf32>
    %26 = tpu.matmul %24, %25, %cst_15 {dimension_numbers = #tpu.dot_dimension_numbers<[1], [0], [0], [1], [0, 0, 1, 1], [], []>} : vector<8x128xbf16>, vector<128x128xbf16>, vector<8x128xf32> -> vector<8x128xf32>
    %c0_16 = arith.constant 0 : index
    %c0_17 = arith.constant 0 : index
    %27 = vector.load %arg8[%c0_16, %c0_17] : memref<1x128xf32, #tpu.memory_space<vmem>>, vector<1x128xf32>
    %28 = vector.broadcast %27 : vector<1x128xf32> to vector<8x128xf32>
    %29 = arith.addf %26, %28 : vector<8x128xf32>
    %30 = arith.mulf %29, %29 : vector<8x128xf32>
    %cst_18 = arith.constant dense<0.000000e+00> : vector<8xf32>
    %31 = vector.multi_reduction <add>, %30, %cst_18 [1] : vector<8x128xf32> to vector<8xf32>
    %32 = vector.shape_cast %31 : vector<8xf32> to vector<8x1xf32>
    %cst_19 = arith.constant 1.000000e-24 : f32
    %33 = vector.broadcast %cst_19 : f32 to vector<8x1xf32>
    %34 = arith.maximumf %32, %33 : vector<8x1xf32>
    %35 = math.rsqrt %34 : vector<8x1xf32>
    %36 = vector.broadcast %35 : vector<8x1xf32> to vector<8x128xf32>
    %37 = arith.mulf %29, %36 : vector<8x128xf32>
    %c0_20 = arith.constant 0 : index
    %c0_21 = arith.constant 0 : index
    %38 = vector.load %arg9[%c0_20, %c0_21] : memref<8x128xf32, #tpu.memory_space<vmem>>, vector<8x128xf32>
    tpu.vector_store %arg9[%c0_20, %c0_21], %37 {strides = array<i32>} : memref<8x128xf32, #tpu.memory_space<vmem>>, vector<8x128xf32>,
    return
  }
  func.func @transform_0(%arg0: i32) -> i32 {
    %c0_i32 = arith.constant 0 : i32
    %c0_i32_0 = arith.constant 0 : i32
    return %c0_i32 : i32
  }
  func.func @transform_1(%arg0: i32) -> (i32, i32) {
    %c0_i32 = arith.constant 0 : i32
    %c0_i32_0 = arith.constant 0 : i32
    return %arg0, %c0_i32 : i32, i32
  }
  func.func @transform_2(%arg0: i32) -> (i32, i32) {
    %c0_i32 = arith.constant 0 : i32
    %c0_i32_0 = arith.constant 0 : i32
    %c0_i32_1 = arith.constant 0 : i32
    return %c0_i32, %c0_i32_0 : i32, i32
  }
  func.func @transform_3(%arg0: i32) -> (i32, i32) {
    %c0_i32 = arith.constant 0 : i32
    %c0_i32_0 = arith.constant 0 : i32
    %c0_i32_1 = arith.constant 0 : i32
    return %c0_i32, %c0_i32_0 : i32, i32
  }
  func.func @transform_4(%arg0: i32) -> (i32, i32) {
    %c0_i32 = arith.constant 0 : i32
    %c0_i32_0 = arith.constant 0 : i32
    %c0_i32_1 = arith.constant 0 : i32
    return %c0_i32, %c0_i32_0 : i32, i32
  }
  func.func @transform_5(%arg0: i32) -> (i32, i32) {
    %c0_i32 = arith.constant 0 : i32
    %c0_i32_0 = arith.constant 0 : i32
    %c0_i32_1 = arith.constant 0 : i32
    return %c0_i32, %c0_i32_0 : i32, i32
  }
  func.func @transform_6(%arg0: i32) -> (i32, i32) {
    %c0_i32 = arith.constant 0 : i32
    %c0_i32_0 = arith.constant 0 : i32
    %c0_i32_1 = arith.constant 0 : i32
    return %c0_i32, %c0_i32_0 : i32, i32
  }
  func.func @transform_7(%arg0: i32) -> (i32, i32) {
    %c0_i32 = arith.constant 0 : i32
    %c0_i32_0 = arith.constant 0 : i32
    %c0_i32_1 = arith.constant 0 : i32
    return %c0_i32, %c0_i32_0 : i32, i32
  }
  func.func @transform_8(%arg0: i32) -> (i32, i32) {
    %c0_i32 = arith.constant 0 : i32
    %c0_i32_0 = arith.constant 0 : i32
    return %arg0, %c0_i32 : i32, i32
  }
}

</mosaic_0001>

<llo_original>
// kernel: tpu_custom_call.1
$region0: #{tpu_custom_call.1}
  #allocation0 [shape = 'u32[]', space=smem, size = 0x4, offset = 0x4, fixed_abs, tag = 'smem constant byte address 0x4 - core index']
  #allocation1 [shape = 'u32[72,128]{1,0:T(1,128)}', space=vmem, size = 0x9000, scoped, tag = 'internal scratch']
  %s0 = inlined_call_operand.hbm [shape: f32[2], index: 0, kind: input, shape index: {}]
  %s1 = inlined_call_operand.hbm [shape: bf16[8,128], index: 1, kind: input, shape index: {}]
  %s2 = inlined_call_operand.hbm [shape: bf16[128,128], index: 2, kind: input, shape index: {}]
  %s3 = inlined_call_operand.vmem [shape: f32[1,128], index: 3, kind: input, shape index: {}]
  %s4 = inlined_call_operand.hbm [shape: bf16[128,128], index: 4, kind: input, shape index: {}]
  %s5 = inlined_call_operand.vmem [shape: f32[1,128], index: 5, kind: input, shape index: {}]
  %s6 = inlined_call_operand.hbm [shape: bf16[128,128], index: 6, kind: input, shape index: {}]
  %s7 = inlined_call_operand.vmem [shape: f32[1,128], index: 7, kind: input, shape index: {}]
  %s8 = inlined_call_operand.hbm [shape: f32[8,128], index: 8, kind: output, shape index: {}]
  %s9 = sld [smem:[#allocation0]]
  $region62: #{tpu_custom_call.1} parent=0
    _
  %s11 = ssub.s32 1, %s9
  %s12 = scalar_select 0, %s11, %s9
  $region1: #{tpu_custom_call.1} parent=0
    #allocation2 [shape = 'u8[512]{0}', space=smem, size = 0x200, scoped, tag = 'input window, operand 0, single buffered']
    #allocation3 [shape = 's32[1]{0}', space=sflag, size = 0x4, scoped, tag = 'scoped memory for tpu_custom_call.1']
    #allocation4 [shape = 's32[1]{0}', space=sflag, size = 0x4, scoped, tag = 'scoped memory for tpu_custom_call.1']
    #allocation5 [shape = 's32[1]{0}', space=sflag, size = 0x4, scoped, tag = 'scoped memory for tpu_custom_call.1']
    #allocation6 [shape = 'u8[2048]{0}', space=vmem, size = 0x800, scoped, tag = 'input window, operand 1, single buffered']
    #allocation7 [shape = 'u8[32768]{0}', space=vmem, size = 0x8000, scoped, tag = 'input window, operand 2, single buffered']
    #allocation8 [shape = 's32[1]{0}', space=sflag, size = 0x4, scoped, tag = 'scoped memory for tpu_custom_call.1']
    #allocation9 [shape = 'u8[32768]{0}', space=vmem, size = 0x8000, scoped, tag = 'input window, operand 4, single buffered']
    #allocation10 [shape = 'u8[32768]{0}', space=vmem, size = 0x8000, scoped, tag = 'input window, operand 6, single buffered']
    #allocation11 [shape = 's32[1]{0}', space=sflag, size = 0x4, scoped, tag = 'scoped memory for tpu_custom_call.1']
    #allocation12 [shape = 'u8[4096]{0}', space=vmem, size = 0x1000, scoped, tag = 'output window, operand 0, single buffered']
    %13 = vsyncpa [#allocation5], 0
    %14 = vsyncpa [#allocation3], 0
    %15 = vsyncpa [#allocation8], 0
    %16 = vsyncpa [#allocation11], 0
    %17 = vsyncpa [#allocation4], 0
    // Predicated region
    $region2: #{tpu_custom_call.1} parent=1 // pred_check
      _
    $region3: #{tpu_custom_call.1} parent=1 // pred_check_branch
      %19 = sbr.rel (0) target = $region5
    $region4: #{tpu_custom_call.1} parent=1 // pred_region
      %21 = vsyncadd [#allocation5], 0
      %s23 = sshll.u32 %s0, 4
      %s24 = int_to_ptr.hbm [resolvable:$true] %s23
      %26 = dma.hbm_to_smem %s24, 16, [#allocation2], [#allocation5]
    $region5: #{tpu_custom_call.1} parent=1 // pred_fallthru
      _
    // Predicated region
    $region6: #{tpu_custom_call.1} parent=1 // pred_check
      _
    $region7: #{tpu_custom_call.1} parent=1 // pred_check_branch
      %28 = sbr.rel (0) target = $region9
    $region8: #{tpu_custom_call.1} parent=1 // pred_region
      %30 = vsyncadd [#allocation3], 0
      %s32 = sshll.u32 %s1, 4
      %s33 = int_to_ptr.hbm [resolvable:$true] %s32
      %s34 = sshll.u32 [#allocation6], 4
      %s35 = int_to_ptr.vmem [resolvable:$true] %s34
      %37 = dma.hbm_to_vmem [thread:$0]  %s33, 64, %s35, [#allocation3]
    $region9: #{tpu_custom_call.1} parent=1 // pred_fallthru
      _
    // Predicated region
    $region10: #{tpu_custom_call.1} parent=1 // pred_check
      _
    $region11: #{tpu_custom_call.1} parent=1 // pred_check_branch
      %39 = sbr.rel (0) target = $region13
    $region12: #{tpu_custom_call.1} parent=1 // pred_region
      %41 = vsyncadd [#allocation8], 0
      %s42 = sshll.u32 %s2, 4
      %s43 = int_to_ptr.hbm [resolvable:$true] %s42
      %s44 = sshll.u32 [#allocation7], 4
      %s45 = int_to_ptr.vmem [resolvable:$true] %s44
      %50 = dma.hbm_to_vmem [thread:$0]  %s43, 1024, %s45, [#allocation8], 64, 64, 4
    $region13: #{tpu_custom_call.1} parent=1 // pred_fallthru
      _
    // Predicated region
    $region14: #{tpu_custom_call.1} parent=1 // pred_check
      _
    $region15: #{tpu_custom_call.1} parent=1 // pred_check_branch
      %52 = sbr.rel (0) target = $region17
    $region16: #{tpu_custom_call.1} parent=1 // pred_region
      _
    $region17: #{tpu_custom_call.1} parent=1 // pred_fallthru
      _
    // Predicated region
    $region18: #{tpu_custom_call.1} parent=1 // pred_check
      _
    $region19: #{tpu_custom_call.1} parent=1 // pred_check_branch
      %54 = sbr.rel (0) target = $region21
    $region20: #{tpu_custom_call.1} parent=1 // pred_region
      %56 = vsyncadd [#allocation8], 0
      %s57 = sshll.u32 %s4, 4
      %s58 = int_to_ptr.hbm [resolvable:$true] %s57
      %s59 = sshll.u32 [#allocation9], 4
      %s60 = int_to_ptr.vmem [resolvable:$true] %s59
      %65 = dma.hbm_to_vmem [thread:$0]  %s58, 1024, %s60, [#allocation8], 64, 64, 4
    $region21: #{tpu_custom_call.1} parent=1 // pred_fallthru
      _
    // Predicated region
    $region22: #{tpu_custom_call.1} parent=1 // pred_check
      _
    $region23: #{tpu_custom_call.1} parent=1 // pred_check_branch
      %67 = sbr.rel (0) target = $region25
    $region24: #{tpu_custom_call.1} parent=1 // pred_region
      _
    $region25: #{tpu_custom_call.1} parent=1 // pred_fallthru
      _
    // Predicated region
    $region26: #{tpu_custom_call.1} parent=1 // pred_check
      _
    $region27: #{tpu_custom_call.1} parent=1 // pred_check_branch
      %69 = sbr.rel (0) target = $region29
    $region28: #{tpu_custom_call.1} parent=1 // pred_region
      %71 = vsyncadd [#allocation11], 0
      %s72 = sshll.u32 %s6, 4
      %s73 = int_to_ptr.hbm [resolvable:$true] %s72
      %s74 = sshll.u32 [#allocation10], 4
      %s75 = int_to_ptr.vmem [resolvable:$true] %s74
      %80 = dma.hbm_to_vmem [thread:$0]  %s73, 1024, %s75, [#allocation11], 64, 64, 4
    $region29: #{tpu_custom_call.1} parent=1 // pred_fallthru
      _
    // Predicated region
    $region30: #{tpu_custom_call.1} parent=1 // pred_check
      _
    $region31: #{tpu_custom_call.1} parent=1 // pred_check_branch
      %82 = sbr.rel (0) target = $region33
    $region32: #{tpu_custom_call.1} parent=1 // pred_region
      _
    $region33: #{tpu_custom_call.1} parent=1 // pred_fallthru
      _
    // Predicated region
    $region34: #{tpu_custom_call.1} parent=1 // pred_check
      _
    $region35: #{tpu_custom_call.1} parent=1 // pred_check_branch
      %84 = sbr.rel (0) target = $region37
    $region36: #{tpu_custom_call.1} parent=1 // pred_region
      %86 = dma.done [#allocation5], 16
    $region37: #{tpu_custom_call.1} parent=1 // pred_fallthru
      _
    // Predicated region
    $region38: #{tpu_custom_call.1} parent=1 // pred_check
      _
    $region39: #{tpu_custom_call.1} parent=1 // pred_check_branch
      %88 = sbr.rel (0) target = $region41
    $region40: #{tpu_custom_call.1} parent=1 // pred_region
      %90 = dma.done [#allocation3], 64
    $region41: #{tpu_custom_call.1} parent=1 // pred_fallthru
      _
    // Predicated region
    $region42: #{tpu_custom_call.1} parent=1 // pred_check
      _
    $region43: #{tpu_custom_call.1} parent=1 // pred_check_branch
      %92 = sbr.rel (0) target = $region45
    $region44: #{tpu_custom_call.1} parent=1 // pred_region
      %94 = dma.done [#allocation8], 1024
    $region45: #{tpu_custom_call.1} parent=1 // pred_fallthru
      _
    // Predicated region
    $region46: #{tpu_custom_call.1} parent=1 // pred_check
      _
    $region47: #{tpu_custom_call.1} parent=1 // pred_check_branch
      %96 = sbr.rel (0) target = $region49
    $region48: #{tpu_custom_call.1} parent=1 // pred_region
      %98 = dma.done [#allocation8], 1024
    $region49: #{tpu_custom_call.1} parent=1 // pred_fallthru
      _
    // Predicated region
    $region50: #{tpu_custom_call.1} parent=1 // pred_check
      _
    $region51: #{tpu_custom_call.1} parent=1 // pred_check_branch
      %100 = sbr.rel (0) target = $region53
    $region52: #{tpu_custom_call.1} parent=1 // pred_region
      %102 = dma.done [#allocation11], 1024
    $region53: #{tpu_custom_call.1} parent=1 // pred_fallthru
      _
    %103 = sfence
    %v104 = vld [vmem:[#allocation6] sm:$0xf]
    %v105 = vld [vmem:[#allocation7] sm:$0xf]
    %v106 = vld [vmem:[#allocation7 + $0x4] sm:$0xf]
    %v107 = vld [vmem:[#allocation7 + $0x8] sm:$0xf]
    %v108 = vld [vmem:[#allocation7 + $0xc] sm:$0xf]
    %v109 = vld [vmem:[#allocation7 + $0x10] sm:$0xf]
    %v110 = vld [vmem:[#allocation7 + $0x14] sm:$0xf]
    %v111 = vld [vmem:[#allocation7 + $0x18] sm:$0xf]
    %v112 = vld [vmem:[#allocation7 + $0x1c] sm:$0xf]
    %v113 = vld [vmem:[#allocation7 + $0x20] sm:$0xf]
    %v114 = vld [vmem:[#allocation7 + $0x24] sm:$0xf]
    %v115 = vld [vmem:[#allocation7 + $0x28] sm:$0xf]
    %v116 = vld [vmem:[#allocation7 + $0x2c] sm:$0xf]
    %v117 = vld [vmem:[#allocation7 + $0x30] sm:$0xf]
    %v118 = vld [vmem:[#allocation7 + $0x34] sm:$0xf]
    %v119 = vld [vmem:[#allocation7 + $0x38] sm:$0xf]
    %v120 = vld [vmem:[#allocation7 + $0x3c] sm:$0xf]
    %v121 = vld [vmem:[%s3] sm:$0x1]
    %v123 = vperm.slane %v121, 0
    %v141 = vunpack.c.l.b16 %v105
    %v142 = vunpack.c.l.b16 %v106
    %v143 = vunpack.c.l.b16 %v107
    %v144 = vunpack.c.l.b16 %v108
    %v145 = vunpack.c.l.b16 %v109
    %v146 = vunpack.c.l.b16 %v110
    %v147 = vunpack.c.l.b16 %v111
    %v148 = vunpack.c.l.b16 %v112
    %v149 = vunpack.c.l.b16 %v113
    %v150 = vunpack.c.l.b16 %v114
    %v151 = vunpack.c.l.b16 %v115
    %v152 = vunpack.c.l.b16 %v116
    %v153 = vunpack.c.l.b16 %v117
    %v154 = vunpack.c.l.b16 %v118
    %v155 = vunpack.c.l.b16 %v119
    %v156 = vunpack.c.l.b16 %v120
    %v157 = vpack.c.b16 %v142, %v141
    %v158 = vpack.c.b16 %v144, %v143
    %v159 = vpack.c.b16 %v146, %v145
    %v160 = vpack.c.b16 %v148, %v147
    %v161 = vpack.c.b16 %v150, %v149
    %v162 = vpack.c.b16 %v152, %v151
    %v163 = vpack.c.b16 %v154, %v153
    %v164 = vpack.c.b16 %v156, %v155
    %173 = vmatpush.bf16.msra.mxu0 %v164
    %174 = vmatpush.bf16.msra.mxu0 %v163
    %175 = vmatpush.bf16.msra.mxu0 %v162
    %176 = vmatpush.bf16.msra.mxu0 %v161
    %177 = vmatpush.bf16.msra.mxu0 %v160
    %178 = vmatpush.bf16.msra.mxu0 %v159
    %179 = vmatpush.bf16.msra.mxu0 %v158
    %180 = vmatpush.bf16.msra.mxu0 %v157
    %181 = vmatmul.bf16.gmra.mxu0 %v104
    %v182 = vpop.f32.mrf.mxu0
    %v183 = vadd.f32 %v123, %v182
    %v184 = vpop.f32.mrf.mxu0
    %185 = vdwg.mxu0
    %s186 = sld [smem:[#allocation2]]
    %vm187 = vcmp.ge.f32.partialorder %v183, 0.0
    %v188 = vstv %s186
    %v189 = vmul.f32 %v188, %v183
    %v190 = vsel %vm187, %v183, %v189
    %v191 = vpack.c.bf16 %v190, %v190
    %v192 = vld [vmem:[#allocation9] sm:$0xf]
    %v193 = vld [vmem:[#allocation9 + $0x4] sm:$0xf]
    %v194 = vld [vmem:[#allocation9 + $0x8] sm:$0xf]
    %v195 = vld [vmem:[#allocation9 + $0xc] sm:$0xf]
    %v196 = vld [vmem:[#allocation9 + $0x10] sm:$0xf]
    %v197 = vld [vmem:[#allocation9 + $0x14] sm:$0xf]
    %v198 = vld [vmem:[#allocation9 + $0x18] sm:$0xf]
    %v199 = vld [vmem:[#allocation9 + $0x1c] sm:$0xf]
    %v200 = vld [vmem:[#allocation9 + $0x20] sm:$0xf]
    %v201 = vld [vmem:[#allocation9 + $0x24] sm:$0xf]
    %v202 = vld [vmem:[#allocation9 + $0x28] sm:$0xf]
    %v203 = vld [vmem:[#allocation9 + $0x2c] sm:$0xf]
    %v204 = vld [vmem:[#allocation9 + $0x30] sm:$0xf]
    %v205 = vld [vmem:[#allocation9 + $0x34] sm:$0xf]
    %v206 = vld [vmem:[#allocation9 + $0x38] sm:$0xf]
    %v207 = vld [vmem:[#allocation9 + $0x3c] sm:$0xf]
    %v208 = vld [vmem:[%s5] sm:$0x1]
    %v210 = vperm.slane %v208, 0
    %v228 = vunpack.c.l.b16 %v192
    %v229 = vunpack.c.l.b16 %v193
    %v230 = vunpack.c.l.b16 %v194
    %v231 = vunpack.c.l.b16 %v195
    %v232 = vunpack.c.l.b16 %v196
    %v233 = vunpack.c.l.b16 %v197
    %v234 = vunpack.c.l.b16 %v198
    %v235 = vunpack.c.l.b16 %v199
    %v236 = vunpack.c.l.b16 %v200
    %v237 = vunpack.c.l.b16 %v201
    %v238 = vunpack.c.l.b16 %v202
    %v239 = vunpack.c.l.b16 %v203
    %v240 = vunpack.c.l.b16 %v204
    %v241 = vunpack.c.l.b16 %v205
    %v242 = vunpack.c.l.b16 %v206
    %v243 = vunpack.c.l.b16 %v207
    %v244 = vpack.c.b16 %v229, %v228
    %v245 = vpack.c.b16 %v231, %v230
    %v246 = vpack.c.b16 %v233, %v232
    %v247 = vpack.c.b16 %v235, %v234
    %v248 = vpack.c.b16 %v237, %v236
    %v249 = vpack.c.b16 %v239, %v238
    %v250 = vpack.c.b16 %v241, %v240
    %v251 = vpack.c.b16 %v243, %v242
    %260 = vmatpush.bf16.msra.mxu0 %v251
    %261 = vmatpush.bf16.msra.mxu0 %v250
    %262 = vmatpush.bf16.msra.mxu0 %v249
    %263 = vmatpush.bf16.msra.mxu0 %v248
    %264 = vmatpush.bf16.msra.mxu0 %v247
    %265 = vmatpush.bf16.msra.mxu0 %v246
    %266 = vmatpush.bf16.msra.mxu0 %v245
    %267 = vmatpush.bf16.msra.mxu0 %v244
    %268 = vmatmul.bf16.gmra.mxu0 %v191
    %v269 = vpop.f32.mrf.mxu0
    %v270 = vadd.f32 %v210, %v269
    %v271 = vpop.f32.mrf.mxu0
    %272 = vdwg.mxu0
    %s273 = sld [smem:[#allocation2 + $0x1]]
    %vm274 = vcmp.ge.f32.partialorder %v270, 0.0
    %v275 = vstv %s273
    %v276 = vmul.f32 %v275, %v270
    %v277 = vsel %vm274, %v270, %v276
    %v278 = vpack.c.bf16 %v277, %v277
    %v279 = vld [vmem:[#allocation10] sm:$0xf]
    %v280 = vld [vmem:[#allocation10 + $0x4] sm:$0xf]
    %v281 = vld [vmem:[#allocation10 + $0x8] sm:$0xf]
    %v282 = vld [vmem:[#allocation10 + $0xc] sm:$0xf]
    %v283 = vld [vmem:[#allocation10 + $0x10] sm:$0xf]
    %v284 = vld [vmem:[#allocation10 + $0x14] sm:$0xf]
    %v285 = vld [vmem:[#allocation10 + $0x18] sm:$0xf]
    %v286 = vld [vmem:[#allocation10 + $0x1c] sm:$0xf]
    %v287 = vld [vmem:[#allocation10 + $0x20] sm:$0xf]
    %v288 = vld [vmem:[#allocation10 + $0x24] sm:$0xf]
    %v289 = vld [vmem:[#allocation10 + $0x28] sm:$0xf]
    %v290 = vld [vmem:[#allocation10 + $0x2c] sm:$0xf]
    %v291 = vld [vmem:[#allocation10 + $0x30] sm:$0xf]
    %v292 = vld [vmem:[#allocation10 + $0x34] sm:$0xf]
    %v293 = vld [vmem:[#allocation10 + $0x38] sm:$0xf]
    %v294 = vld [vmem:[#allocation10 + $0x3c] sm:$0xf]
    %v295 = vld [vmem:[%s7] sm:$0x1]
    %v297 = vperm.slane %v295, 0
    %v315 = vunpack.c.l.b16 %v279
    %v316 = vunpack.c.l.b16 %v280
    %v317 = vunpack.c.l.b16 %v281
    %v318 = vunpack.c.l.b16 %v282
    %v319 = vunpack.c.l.b16 %v283
    %v320 = vunpack.c.l.b16 %v284
    %v321 = vunpack.c.l.b16 %v285
    %v322 = vunpack.c.l.b16 %v286
    %v323 = vunpack.c.l.b16 %v287
    %v324 = vunpack.c.l.b16 %v288
    %v325 = vunpack.c.l.b16 %v289
    %v326 = vunpack.c.l.b16 %v290
    %v327 = vunpack.c.l.b16 %v291
    %v328 = vunpack.c.l.b16 %v292
    %v329 = vunpack.c.l.b16 %v293
    %v330 = vunpack.c.l.b16 %v294
    %v331 = vpack.c.b16 %v316, %v315
    %v332 = vpack.c.b16 %v318, %v317
    %v333 = vpack.c.b16 %v320, %v319
    %v334 = vpack.c.b16 %v322, %v321
    %v335 = vpack.c.b16 %v324, %v323
    %v336 = vpack.c.b16 %v326, %v325
    %v337 = vpack.c.b16 %v328, %v327
    %v338 = vpack.c.b16 %v330, %v329
    %347 = vmatpush.bf16.msra.mxu0 %v338
    %348 = vmatpush.bf16.msra.mxu0 %v337
    %349 = vmatpush.bf16.msra.mxu0 %v336
    %350 = vmatpush.bf16.msra.mxu0 %v335
    %351 = vmatpush.bf16.msra.mxu0 %v334
    %352 = vmatpush.bf16.msra.mxu0 %v333
    %353 = vmatpush.bf16.msra.mxu0 %v332
    %354 = vmatpush.bf16.msra.mxu0 %v331
    %355 = vmatmul.bf16.gmra.mxu0 %v278
    %v356 = vpop.f32.mrf.mxu0
    %v357 = vadd.f32 %v297, %v356
    %v358 = vpop.f32.mrf.mxu0
    %359 = vdwg.mxu0
    %v360 = vmul.f32 %v357, %v357
    %361 = vadd.xlane.f32.xlu0 %v360
    %v362 = vpop.xlane.xlu0 %361
    %v363 = vmax.f32 %v362, 1e-24
    %v364 = vrsqrt.pop %v363
    %v365 = vmul.f32 %v364, %v363
    %v366 = vmul.f32 %v365, %v364
    %v367 = vmul.f32 0.5, %v366
    %v368 = vsub.f32 1.5, %v367
    %v369 = vmul.f32 %v364, %v368
    %vm370 = vweird.f32 %v363
    %vm371 = vweird.f32 %v364
    %vm372 = vmor %vm370, %vm371
    %v373 = vsel %vm372, %v364, %v369
    %v374 = vmul.f32 %v357, %v373
    %375 = vst [vmem:[#allocation12] sm:$0xff] %v374
    // Predicated region
    $region54: #{tpu_custom_call.1} parent=1 // pred_check
      _
    $region55: #{tpu_custom_call.1} parent=1 // pred_check_branch
      %377 = sbr.rel (0) target = $region57
    $region56: #{tpu_custom_call.1} parent=1 // pred_region
      %379 = vsyncadd [#allocation4], 0
      %s381 = sshll.u32 [#allocation12], 4
      %s382 = int_to_ptr.vmem [resolvable:$true] %s381
      %s383 = sshll.u32 %s8, 4
      %s384 = int_to_ptr.hbm [resolvable:$true] %s383
      %386 = dma.vmem_to_hbm [thread:$0]  %s382, 128, %s384, [#allocation4]
    $region57: #{tpu_custom_call.1} parent=1 // pred_fallthru
      _
    // Predicated region
    $region58: #{tpu_custom_call.1} parent=1 // pred_check
      _
    $region59: #{tpu_custom_call.1} parent=1 // pred_check_branch
      %388 = sbr.rel (0) target = $region61
    $region60: #{tpu_custom_call.1} parent=1 // pred_region
      %390 = dma.done [#allocation4], 128
    $region61: #{tpu_custom_call.1} parent=1 // pred_fallthru
      _
    %391 = vsyncpa [#allocation3], 1
    %392 = vsyncpa [#allocation8], 1
    %393 = vsyncpa [#allocation11], 1
    %394 = vsyncpa [#allocation4], 1
    %395 = vsyncpa [#allocation5], 1

// kernel: tpu_custom_call.1
$region0: #{tpu_custom_call.1}
  #allocation0 [shape = 'u32[]', space=smem, size = 0x4, offset = 0x4, fixed_abs, tag = 'smem constant byte address 0x4 - core index']
  #allocation1 [shape = 'u32[72,128]{1,0:T(1,128)}', space=vmem, size = 0x9000, scoped, tag = 'internal scratch']
  %s0 = inlined_call_operand.hbm [shape: f32[2], index: 0, kind: input, shape index: {}]
  %s1 = inlined_call_operand.hbm [shape: bf16[8,128], index: 1, kind: input, shape index: {}]
  %s2 = inlined_call_operand.hbm [shape: bf16[128,128], index: 2, kind: input, shape index: {}]
  %s3 = inlined_call_operand.vmem [shape: f32[1,128], index: 3, kind: input, shape index: {}]
  %s4 = inlined_call_operand.hbm [shape: bf16[128,128], index: 4, kind: input, shape index: {}]
  %s5 = inlined_call_operand.vmem [shape: f32[1,128], index: 5, kind: input, shape index: {}]
  %s6 = inlined_call_operand.hbm [shape: bf16[128,128], index: 6, kind: input, shape index: {}]
  %s7 = inlined_call_operand.vmem [shape: f32[1,128], index: 7, kind: input, shape index: {}]
  %s8 = inlined_call_operand.hbm [shape: f32[8,128], index: 8, kind: output, shape index: {}]
  %s9 = sld [smem:[#allocation0]]
  $region62: #{tpu_custom_call.1} parent=0
    _
  %s11 = ssub.s32 1, %s9
  %s12 = scalar_select 0, %s11, %s9
  $region1: #{tpu_custom_call.1} parent=0
    #allocation2 [shape = 'u8[512]{0}', space=smem, size = 0x200, scoped, tag = 'input window, operand 0, single buffered']
    #allocation3 [shape = 's32[1]{0}', space=sflag, size = 0x4, scoped, tag = 'scoped memory for tpu_custom_call.1']
    #allocation4 [shape = 's32[1]{0}', space=sflag, size = 0x4, scoped, tag = 'scoped memory for tpu_custom_call.1']
    #allocation5 [shape = 's32[1]{0}', space=sflag, size = 0x4, scoped, tag = 'scoped memory for tpu_custom_call.1']
    #allocation6 [shape = 'u8[2048]{0}', space=vmem, size = 0x800, scoped, tag = 'input window, operand 1, single buffered']
    #allocation7 [shape = 'u8[32768]{0}', space=vmem, size = 0x8000, scoped, tag = 'input window, operand 2, single buffered']
    #allocation8 [shape = 's32[1]{0}', space=sflag, size = 0x4, scoped, tag = 'scoped memory for tpu_custom_call.1']
    #allocation9 [shape = 'u8[32768]{0}', space=vmem, size = 0x8000, scoped, tag = 'input window, operand 4, single buffered']
    #allocation10 [shape = 'u8[32768]{0}', space=vmem, size = 0x8000, scoped, tag = 'input window, operand 6, single buffered']
    #allocation11 [shape = 's32[1]{0}', space=sflag, size = 0x4, scoped, tag = 'scoped memory for tpu_custom_call.1']
    #allocation12 [shape = 'u8[4096]{0}', space=vmem, size = 0x1000, scoped, tag = 'output window, operand 0, single buffered']
    %13 = vsyncpa [#allocation5], 0
    %14 = vsyncpa [#allocation3], 0
    %15 = vsyncpa [#allocation8], 0
    %16 = vsyncpa [#allocation11], 0
    %17 = vsyncpa [#allocation4], 0
    // Predicated region
    $region2: #{tpu_custom_call.1} parent=1 // pred_check
      _
    $region3: #{tpu_custom_call.1} parent=1 // pred_check_branch
      %19 = sbr.rel (0) target = $region5
    $region4: #{tpu_custom_call.1} parent=1 // pred_region
      %21 = vsyncadd [#allocation5], 0
      %s23 = sshll.u32 %s0, 4
      %s24 = int_to_ptr.hbm [resolvable:$true] %s23
      %26 = dma.hbm_to_smem %s24, 16, [#allocation2], [#allocation5]
    $region5: #{tpu_custom_call.1} parent=1 // pred_fallthru
      _
    // Predicated region
    $region6: #{tpu_custom_call.1} parent=1 // pred_check
      _
    $region7: #{tpu_custom_call.1} parent=1 // pred_check_branch
      %28 = sbr.rel (0) target = $region9
    $region8: #{tpu_custom_call.1} parent=1 // pred_region
      %30 = vsyncadd [#allocation3], 0
      %s32 = sshll.u32 %s1, 4
      %s33 = int_to_ptr.hbm [resolvable:$true] %s32
      %s34 = sshll.u32 [#allocation6], 4
      %s35 = int_to_ptr.vmem [resolvable:$true] %s34
      %37 = dma.hbm_to_vmem [thread:$0]  %s33, 64, %s35, [#allocation3]
    $region9: #{tpu_custom_call.1} parent=1 // pred_fallthru
      _
    // Predicated region
    $region10: #{tpu_custom_call.1} parent=1 // pred_check
      _
    $region11: #{tpu_custom_call.1} parent=1 // pred_check_branch
      %39 = sbr.rel (0) target = $region13
    $region12: #{tpu_custom_call.1} parent=1 // pred_region
      %41 = vsyncadd [#allocation8], 0
      %s42 = sshll.u32 %s2, 4
      %s43 = int_to_ptr.hbm [resolvable:$true] %s42
      %s44 = sshll.u32 [#allocation7], 4
      %s45 = int_to_ptr.vmem [resolvable:$true] %s44
      %50 = dma.hbm_to_vmem [thread:$0]  %s43, 1024, %s45, [#allocation8], 64, 64, 4
    $region13: #{tpu_custom_call.1} parent=1 // pred_fallthru
      _
    // Predicated region
    $region14: #{tpu_custom_call.1} parent=1 // pred_check
      _
    $region15: #{tpu_custom_call.1} parent=1 // pred_check_branch
      %52 = sbr.rel (0) target = $region17
    $region16: #{tpu_custom_call.1} parent=1 // pred_region
      _
    $region17: #{tpu_custom_call.1} parent=1 // pred_fallthru
      _
    // Predicated region
    $region18: #{tpu_custom_call.1} parent=1 // pred_check
      _
    $region19: #{tpu_custom_call.1} parent=1 // pred_check_branch
      %54 = sbr.rel (0) target = $region21
    $region20: #{tpu_custom_call.1} parent=1 // pred_region
      %56 = vsyncadd [#allocation8], 0
      %s57 = sshll.u32 %s4, 4
      %s58 = int_to_ptr.hbm [resolvable:$true] %s57
      %s59 = sshll.u32 [#allocation9], 4
      %s60 = int_to_ptr.vmem [resolvable:$true] %s59
      %65 = dma.hbm_to_vmem [thread:$0]  %s58, 1024, %s60, [#allocation8], 64, 64, 4
    $region21: #{tpu_custom_call.1} parent=1 // pred_fallthru
      _
    // Predicated region
    $region22: #{tpu_custom_call.1} parent=1 // pred_check
      _
    $region23: #{tpu_custom_call.1} parent=1 // pred_check_branch
      %67 = sbr.rel (0) target = $region25
    $region24: #{tpu_custom_call.1} parent=1 // pred_region
      _
    $region25: #{tpu_custom_call.1} parent=1 // pred_fallthru
      _
    // Predicated region
    $region26: #{tpu_custom_call.1} parent=1 // pred_check
      _
    $region27: #{tpu_custom_call.1} parent=1 // pred_check_branch
      %69 = sbr.rel (0) target = $region29
    $region28: #{tpu_custom_call.1} parent=1 // pred_region
      %71 = vsyncadd [#allocation11], 0
      %s72 = sshll.u32 %s6, 4
      %s73 = int_to_ptr.hbm [resolvable:$true] %s72
      %s74 = sshll.u32 [#allocation10], 4
      %s75 = int_to_ptr.vmem [resolvable:$true] %s74
      %80 = dma.hbm_to_vmem [thread:$0]  %s73, 1024, %s75, [#allocation11], 64, 64, 4
    $region29: #{tpu_custom_call.1} parent=1 // pred_fallthru
      _
    // Predicated region
    $region30: #{tpu_custom_call.1} parent=1 // pred_check
      _
    $region31: #{tpu_custom_call.1} parent=1 // pred_check_branch
      %82 = sbr.rel (0) target = $region33
    $region32: #{tpu_custom_call.1} parent=1 // pred_region
      _
    $region33: #{tpu_custom_call.1} parent=1 // pred_fallthru
      _
    // Predicated region
    $region34: #{tpu_custom_call.1} parent=1 // pred_check
      _
    $region35: #{tpu_custom_call.1} parent=1 // pred_check_branch
      %84 = sbr.rel (0) target = $region37
    $region36: #{tpu_custom_call.1} parent=1 // pred_region
      %86 = dma.done [#allocation5], 16
    $region37: #{tpu_custom_call.1} parent=1 // pred_fallthru
      _
    // Predicated region
    $region38: #{tpu_custom_call.1} parent=1 // pred_check
      _
    $region39: #{tpu_custom_call.1} parent=1 // pred_check_branch
      %88 = sbr.rel (0) target = $region41
    $region40: #{tpu_custom_call.1} parent=1 // pred_region
      %90 = dma.done [#allocation3], 64
    $region41: #{tpu_custom_call.1} parent=1 // pred_fallthru
      _
    // Predicated region
    $region42: #{tpu_custom_call.1} parent=1 // pred_check
      _
    $region43: #{tpu_custom_call.1} parent=1 // pred_check_branch
      %92 = sbr.rel (0) target = $region45
    $region44: #{tpu_custom_call.1} parent=1 // pred_region
      %94 = dma.done [#allocation8], 1024
    $region45: #{tpu_custom_call.1} parent=1 // pred_fallthru
      _
    // Predicated region
    $region46: #{tpu_custom_call.1} parent=1 // pred_check
      _
    $region47: #{tpu_custom_call.1} parent=1 // pred_check_branch
      %96 = sbr.rel (0) target = $region49
    $region48: #{tpu_custom_call.1} parent=1 // pred_region
      %98 = dma.done [#allocation8], 1024
    $region49: #{tpu_custom_call.1} parent=1 // pred_fallthru
      _
    // Predicated region
    $region50: #{tpu_custom_call.1} parent=1 // pred_check
      _
    $region51: #{tpu_custom_call.1} parent=1 // pred_check_branch
      %100 = sbr.rel (0) target = $region53
    $region52: #{tpu_custom_call.1} parent=1 // pred_region
      %102 = dma.done [#allocation11], 1024
    $region53: #{tpu_custom_call.1} parent=1 // pred_fallthru
      _
    %103 = sfence
    %v104 = vld [vmem:[#allocation6] sm:$0xf]
    %v105 = vld [vmem:[#allocation7] sm:$0xf]
    %v106 = vld [vmem:[#allocation7 + $0x4] sm:$0xf]
    %v107 = vld [vmem:[#allocation7 + $0x8] sm:$0xf]
    %v108 = vld [vmem:[#allocation7 + $0xc] sm:$0xf]
    %v109 = vld [vmem:[#allocation7 + $0x10] sm:$0xf]
    %v110 = vld [vmem:[#allocation7 + $0x14] sm:$0xf]
    %v111 = vld [vmem:[#allocation7 + $0x18] sm:$0xf]
    %v112 = vld [vmem:[#allocation7 + $0x1c] sm:$0xf]
    %v113 = vld [vmem:[#allocation7 + $0x20] sm:$0xf]
    %v114 = vld [vmem:[#allocation7 + $0x24] sm:$0xf]
    %v115 = vld [vmem:[#allocation7 + $0x28] sm:$0xf]
    %v116 = vld [vmem:[#allocation7 + $0x2c] sm:$0xf]
    %v117 = vld [vmem:[#allocation7 + $0x30] sm:$0xf]
    %v118 = vld [vmem:[#allocation7 + $0x34] sm:$0xf]
    %v119 = vld [vmem:[#allocation7 + $0x38] sm:$0xf]
    %v120 = vld [vmem:[#allocation7 + $0x3c] sm:$0xf]
    %v121 = vld [vmem:[%s3] sm:$0x1]
    %v123 = vperm.slane %v121, 0
    %v141 = vunpack.c.l.b16 %v105
    %v142 = vunpack.c.l.b16 %v106
    %v143 = vunpack.c.l.b16 %v107
    %v144 = vunpack.c.l.b16 %v108
    %v145 = vunpack.c.l.b16 %v109
    %v146 = vunpack.c.l.b16 %v110
    %v147 = vunpack.c.l.b16 %v111
    %v148 = vunpack.c.l.b16 %v112
    %v149 = vunpack.c.l.b16 %v113
    %v150 = vunpack.c.l.b16 %v114
    %v151 = vunpack.c.l.b16 %v115
    %v152 = vunpack.c.l.b16 %v116
    %v153 = vunpack.c.l.b16 %v117
    %v154 = vunpack.c.l.b16 %v118
    %v155 = vunpack.c.l.b16 %v119
    %v156 = vunpack.c.l.b16 %v120
    %v157 = vpack.c.b16 %v142, %v141
    %v158 = vpack.c.b16 %v144, %v143
    %v159 = vpack.c.b16 %v146, %v145
    %v160 = vpack.c.b16 %v148, %v147
    %v161 = vpack.c.b16 %v150, %v149
    %v162 = vpack.c.b16 %v152, %v151
    %v163 = vpack.c.b16 %v154, %v153
    %v164 = vpack.c.b16 %v156, %v155
    %173 = vmatpush.bf16.msra.mxu0 %v164
    %174 = vmatpush.bf16.msra.mxu0 %v163
    %175 = vmatpush.bf16.msra.mxu0 %v162
    %176 = vmatpush.bf16.msra.mxu0 %v161
    %177 = vmatpush.bf16.msra.mxu0 %v160
    %178 = vmatpush.bf16.msra.mxu0 %v159
    %179 = vmatpush.bf16.msra.mxu0 %v158
    %180 = vmatpush.bf16.msra.mxu0 %v157
    %181 = vmatmul.bf16.gmra.mxu0 %v104
    %v182 = vpop.f32.mrf.mxu0
    %v183 = vadd.f32 %v123, %v182
    %v184 = vpop.f32.mrf.mxu0
    %185 = vdwg.mxu0
    %s186 = sld [smem:[#allocation2]]
    %vm187 = vcmp.ge.f32.partialorder %v183, 0.0
    %v188 = vstv %s186
    %v189 = vmul.f32 %v188, %v183
    %v190 = vsel %vm187, %v183, %v189
    %v191 = vpack.c.bf16 %v190, %v190
    %v192 = vld [vmem:[#allocation9] sm:$0xf]
    %v193 = vld [vmem:[#allocation9 + $0x4] sm:$0xf]
    %v194 = vld [vmem:[#allocation9 + $0x8] sm:$0xf]
    %v195 = vld [vmem:[#allocation9 + $0xc] sm:$0xf]
    %v196 = vld [vmem:[#allocation9 + $0x10] sm:$0xf]
    %v197 = vld [vmem:[#allocation9 + $0x14] sm:$0xf]
    %v198 = vld [vmem:[#allocation9 + $0x18] sm:$0xf]
    %v199 = vld [vmem:[#allocation9 + $0x1c] sm:$0xf]
    %v200 = vld [vmem:[#allocation9 + $0x20] sm:$0xf]
    %v201 = vld [vmem:[#allocation9 + $0x24] sm:$0xf]
    %v202 = vld [vmem:[#allocation9 + $0x28] sm:$0xf]
    %v203 = vld [vmem:[#allocation9 + $0x2c] sm:$0xf]
    %v204 = vld [vmem:[#allocation9 + $0x30] sm:$0xf]
    %v205 = vld [vmem:[#allocation9 + $0x34] sm:$0xf]
    %v206 = vld [vmem:[#allocation9 + $0x38] sm:$0xf]
    %v207 = vld [vmem:[#allocation9 + $0x3c] sm:$0xf]
    %v208 = vld [vmem:[%s5] sm:$0x1]
    %v210 = vperm.slane %v208, 0
    %v228 = vunpack.c.l.b16 %v192
    %v229 = vunpack.c.l.b16 %v193
    %v230 = vunpack.c.l.b16 %v194
    %v231 = vunpack.c.l.b16 %v195
    %v232 = vunpack.c.l.b16 %v196
    %v233 = vunpack.c.l.b16 %v197
    %v234 = vunpack.c.l.b16 %v198
    %v235 = vunpack.c.l.b16 %v199
    %v236 = vunpack.c.l.b16 %v200
    %v237 = vunpack.c.l.b16 %v201
    %v238 = vunpack.c.l.b16 %v202
    %v239 = vunpack.c.l.b16 %v203
    %v240 = vunpack.c.l.b16 %v204
    %v241 = vunpack.c.l.b16 %v205
    %v242 = vunpack.c.l.b16 %v206
    %v243 = vunpack.c.l.b16 %v207
    %v244 = vpack.c.b16 %v229, %v228
    %v245 = vpack.c.b16 %v231, %v230
    %v246 = vpack.c.b16 %v233, %v232
    %v247 = vpack.c.b16 %v235, %v234
    %v248 = vpack.c.b16 %v237, %v236
    %v249 = vpack.c.b16 %v239, %v238
    %v250 = vpack.c.b16 %v241, %v240
    %v251 = vpack.c.b16 %v243, %v242
    %260 = vmatpush.bf16.msra.mxu0 %v251
    %261 = vmatpush.bf16.msra.mxu0 %v250
    %262 = vmatpush.bf16.msra.mxu0 %v249
    %263 = vmatpush.bf16.msra.mxu0 %v248
    %264 = vmatpush.bf16.msra.mxu0 %v247
    %265 = vmatpush.bf16.msra.mxu0 %v246
    %266 = vmatpush.bf16.msra.mxu0 %v245
    %267 = vmatpush.bf16.msra.mxu0 %v244
    %268 = vmatmul.bf16.gmra.mxu0 %v191
    %v269 = vpop.f32.mrf.mxu0
    %v270 = vadd.f32 %v210, %v269
    %v271 = vpop.f32.mrf.mxu0
    %272 = vdwg.mxu0
    %s273 = sld [smem:[#allocation2 + $0x1]]
    %vm274 = vcmp.ge.f32.partialorder %v270, 0.0
    %v275 = vstv %s273
    %v276 = vmul.f32 %v275, %v270
    %v277 = vsel %vm274, %v270, %v276
    %v278 = vpack.c.bf16 %v277, %v277
    %v279 = vld [vmem:[#allocation10] sm:$0xf]
    %v280 = vld [vmem:[#allocation10 + $0x4] sm:$0xf]
    %v281 = vld [vmem:[#allocation10 + $0x8] sm:$0xf]
    %v282 = vld [vmem:[#allocation10 + $0xc] sm:$0xf]
    %v283 = vld [vmem:[#allocation10 + $0x10] sm:$0xf]
    %v284 = vld [vmem:[#allocation10 + $0x14] sm:$0xf]
    %v285 = vld [vmem:[#allocation10 + $0x18] sm:$0xf]
    %v286 = vld [vmem:[#allocation10 + $0x1c] sm:$0xf]
    %v287 = vld [vmem:[#allocation10 + $0x20] sm:$0xf]
    %v288 = vld [vmem:[#allocation10 + $0x24] sm:$0xf]
    %v289 = vld [vmem:[#allocation10 + $0x28] sm:$0xf]
    %v290 = vld [vmem:[#allocation10 + $0x2c] sm:$0xf]
    %v291 = vld [vmem:[#allocation10 + $0x30] sm:$0xf]
    %v292 = vld [vmem:[#allocation10 + $0x34] sm:$0xf]
    %v293 = vld [vmem:[#allocation10 + $0x38] sm:$0xf]
    %v294 = vld [vmem:[#allocation10 + $0x3c] sm:$0xf]
    %v295 = vld [vmem:[%s7] sm:$0x1]
    %v297 = vperm.slane %v295, 0
    %v315 = vunpack.c.l.b16 %v279
    %v316 = vunpack.c.l.b16 %v280
    %v317 = vunpack.c.l.b16 %v281
    %v318 = vunpack.c.l.b16 %v282
    %v319 = vunpack.c.l.b16 %v283
    %v320 = vunpack.c.l.b16 %v284
    %v321 = vunpack.c.l.b16 %v285
    %v322 = vunpack.c.l.b16 %v286
    %v323 = vunpack.c.l.b16 %v287
    %v324 = vunpack.c.l.b16 %v288
    %v325 = vunpack.c.l.b16 %v289
    %v326 = vunpack.c.l.b16 %v290
    %v327 = vunpack.c.l.b16 %v291
    %v328 = vunpack.c.l.b16 %v292
    %v329 = vunpack.c.l.b16 %v293
    %v330 = vunpack.c.l.b16 %v294
    %v331 = vpack.c.b16 %v316, %v315
    %v332 = vpack.c.b16 %v318, %v317
    %v333 = vpack.c.b16 %v320, %v319
    %v334 = vpack.c.b16 %v322, %v321
    %v335 = vpack.c.b16 %v324, %v323
    %v336 = vpack.c.b16 %v326, %v325
    %v337 = vpack.c.b16 %v328, %v327
    %v338 = vpack.c.b16 %v330, %v329
    %347 = vmatpush.bf16.msra.mxu0 %v338
    %348 = vmatpush.bf16.msra.mxu0 %v337
    %349 = vmatpush.bf16.msra.mxu0 %v336
    %350 = vmatpush.bf16.msra.mxu0 %v335
    %351 = vmatpush.bf16.msra.mxu0 %v334
    %352 = vmatpush.bf16.msra.mxu0 %v333
    %353 = vmatpush.bf16.msra.mxu0 %v332
    %354 = vmatpush.bf16.msra.mxu0 %v331
    %355 = vmatmul.bf16.gmra.mxu0 %v278
    %v356 = vpop.f32.mrf.mxu0
    %v357 = vadd.f32 %v297, %v356
    %v358 = vpop.f32.mrf.mxu0
    %359 = vdwg.mxu0
    %v360 = vmul.f32 %v357, %v357
    %361 = vadd.xlane.f32.xlu0 %v360
    %v362 = vpop.xlane.xlu0 %361
    %v363 = vmax.f32 %v362, 1e-24
    %v364 = vrsqrt.pop %v363
    %v365 = vmul.f32 %v364, %v363
    %v366 = vmul.f32 %v365, %v364
    %v367 = vmul.f32 0.5, %v366
    %v368 = vsub.f32 1.5, %v367
    %v369 = vmul.f32 %v364, %v368
    %vm370 = vweird.f32 %v363
    %vm371 = vweird.f32 %v364
    %vm372 = vmor %vm370, %vm371
    %v373 = vsel %vm372, %v364, %v369
    %v374 = vmul.f32 %v357, %v373
    %375 = vst [vmem:[#allocation12] sm:$0xff] %v374
    // Predicated region
    $region54: #{tpu_custom_call.1} parent=1 // pred_check
      _
    $region55: #{tpu_custom_call.1} parent=1 // pred_check_branch
      %377 = sbr.rel (0) target = $region57
    $region56: #{tpu_custom_call.1} parent=1 // pred_region
      %379 = vsyncadd [#allocation4], 0
      %s381 = sshll.u32 [#allocation12], 4
      %s382 = int_to_ptr.vmem [resolvable:$true] %s381
      %s383 = sshll.u32 %s8, 4
      %s384 = int_to_ptr.hbm [resolvable:$true] %s383
      %386 = dma.vmem_to_hbm [thread:$0]  %s382, 128, %s384, [#allocation4]
    $region57: #{tpu_custom_call.1} parent=1 // pred_fallthru
      _
    // Predicated region
    $region58: #{tpu_custom_call.1} parent=1 // pred_check
      _
    $region59: #{tpu_custom_call.1} parent=1 // pred_check_branch
      %388 = sbr.rel (0) target = $region61
    $region60: #{tpu_custom_call.1} parent=1 // pred_region
      %390 = dma.done [#allocation4], 128
    $region61: #{tpu_custom_call.1} parent=1 // pred_fallthru
      _
    %391 = vsyncpa [#allocation3], 1
    %392 = vsyncpa [#allocation8], 1
    %393 = vsyncpa [#allocation11], 1
    %394 = vsyncpa [#allocation4], 1
    %395 = vsyncpa [#allocation5], 1

</llo_original>
